<compile_context>
chip_gen: v7x
topology: tpu7x:2x2x1
jax: 0.10.0
libtpu: 0.0.40
codegen_flags: <defaults>
</compile_context>

<pallas_src>
import jax
import jax.numpy as jnp
from jax.experimental import pallas as pl
from jax.experimental.pallas import tpu as pltpu

B, L, H, VOCAB = 2, 8, 32, 50


def _clamp(i, hi):
    # Pallas does not bounds-check VMEM dynamic slices; clamp like jnp gather.
    return jnp.minimum(jnp.maximum(i, 0), hi)


# ---------- fully fused: embedding gather + base encoder + 'cls' pooler ------
def _cls_kernel(word_ref, mask_ref, emb_ref, wb_ref, bb_ref, wp_ref, bp_ref,
                out_ref):
    # word_ref: (B, L) i32 SMEM, mask_ref: (B, L) f32 SMEM,
    # emb_ref: (VOCAB, H) VMEM, wb/wp: (H, H), bb/bp: (1, H), out: (B, H).
    # Base encoder is token-wise -> only token 0 feeds SingleTokenPooler.
    rows = []
    for b in range(B):
        idx = _clamp(word_ref[b, 0], VOCAB - 1)
        m = mask_ref[b, 0]                                # f32 scalar
        rows.append(emb_ref[pl.ds(idx, 1), :] * m)        # (1, H)
    x0 = jnp.concatenate(rows, axis=0)                    # (B, H)
    enc0 = jnp.tanh(
        jnp.dot(x0, wb_ref[...], preferred_element_type=jnp.float32)
        + bb_ref[...])                                    # (B, H)
    out_ref[...] = jnp.tanh(
        jnp.dot(enc0, wp_ref[...], preferred_element_type=jnp.float32)
        + bp_ref[...])                                    # one contiguous store


def cls_forward(word, mask_f, embedding, w_base, b_base, w_pool, b_pool):
    smem = pl.BlockSpec(memory_space=pltpu.MemorySpace.SMEM)
    vmem = pl.BlockSpec(memory_space=pltpu.MemorySpace.VMEM)
    return pl.pallas_call(
        _cls_kernel,
        out_shape=jax.ShapeDtypeStruct((B, H), jnp.float32),
        in_specs=[smem, smem, vmem, vmem, vmem, vmem, vmem],
        out_specs=vmem,
    )(word, mask_f, embedding, w_base, b_base, w_pool, b_pool)


# ------ fully fused: embedding gather + base encoder + 'cat_entity_reps' -----
def _cat_kernel(word_ref, mask_ref, pos1_ref, pos2_ref, emb_ref, wb_ref,
                bb_ref, out_ref):
    # word_ref/mask_ref: (B, L) SMEM; pos1_ref/pos2_ref: (B,) i32 SMEM;
    # emb_ref: (VOCAB, H) VMEM; wb: (H, H); bb: (1, H); out: (B, 2H).
    # Token-wise base encoder: gather ONLY the two entity tokens per batch
    # element before the matmul (L/2 = 4x less MXU work, no (B,L,H) scratch).
    rows = []
    for pos_ref in (pos1_ref, pos2_ref):
        for b in range(B):
            p = _clamp(pos_ref[b], L - 1)
            idx = _clamp(word_ref[b, p], VOCAB - 1)
            m = mask_ref[b, p]                             # f32 scalar
            rows.append(emb_ref[pl.ds(idx, 1), :] * m)     # (1, H)
    # Row order: [h_0 .. h_{B-1}, t_0 .. t_{B-1}]  -> one (2B, H) matmul.
    x = jnp.concatenate(rows, axis=0)                      # (2B, H)
    enc = jnp.tanh(
        jnp.dot(x, wb_ref[...], preferred_element_type=jnp.float32)
        + bb_ref[...])                                     # (2B, H)
    # Two contiguous static-slice stores (no per-batch partial writes).
    out_ref[:, 0:H] = enc[0:B, :]
    out_ref[:, H:2 * H] = enc[B:2 * B, :]


def cat_forward(word, mask_f, pos1, pos2, embedding, w_base, b_base):
    smem = pl.BlockSpec(memory_space=pltpu.MemorySpace.SMEM)
    vmem = pl.BlockSpec(memory_space=pltpu.MemorySpace.VMEM)
    return pl.pallas_call(
        _cat_kernel,
        out_shape=jax.ShapeDtypeStruct((B, 2 * H), jnp.float32),
        in_specs=[smem, smem, smem, smem, vmem, vmem, vmem],
        out_specs=vmem,
    )(word, mask_f, pos1, pos2, embedding, w_base, b_base)


# ----------------------- ModularEncoder.forward ------------------------------
def modular_encoder_forward(params, inputs, strategy="cls"):
    word = inputs["word"].astype(jnp.int32)
    mask_f = inputs["mask"].astype(jnp.float32)
    if strategy == "cls":
        return cls_forward(word, mask_f, params["embedding"],
                           params["w_base"], params["b_base"],
                           params["w_pool"], params["b_pool"])
    elif strategy == "cat_entity_reps":
        return cat_forward(word, mask_f,
                           inputs["pos1"].astype(jnp.int32),
                           inputs["pos2"].astype(jnp.int32),
                           params["embedding"], params["w_base"],
                           params["b_base"])
    else:
        raise NotImplementedError("Bad pooling strategy:" + strategy)


# ----------------------- pure-JAX reference ----------------------------------
def reference(params, inputs, strategy):
    emb = params["embedding"][inputs["word"]]
    x = emb * inputs["mask"].astype(jnp.float32)[..., None]
    enc = jnp.tanh(x @ params["w_base"] + params["b_base"][0])
    if strategy == "cls":
        return jnp.tanh(enc[:, 0] @ params["w_pool"] + params["b_pool"][0])
    rng = jnp.arange(B)
    h = enc[rng, inputs["pos1"]]
    t = enc[rng, inputs["pos2"]]
    return jnp.concatenate([h, t], axis=-1)


if __name__ == "__main__":
    key = jax.random.PRNGKey(0)
    k_emb, k_wb, k_bb, k_wp, k_bp, k_word, k_pos = jax.random.split(key, 7)

    params = {
        "embedding": jax.random.normal(k_emb, (VOCAB, H), jnp.float32) * 0.1,
        "w_base": jax.random.normal(k_wb, (H, H), jnp.float32) * 0.1,
        "b_base": jax.random.normal(k_bb, (1, H), jnp.float32) * 0.1,
        "w_pool": jax.random.normal(k_wp, (H, H), jnp.float32) * 0.1,
        "b_pool": jax.random.normal(k_bp, (1, H), jnp.float32) * 0.1,
    }

    word = jax.random.randint(k_word, (B, L), 0, VOCAB, dtype=jnp.int32)
    mask = jnp.concatenate(
        [jnp.ones((B, L - 2), jnp.int32), jnp.zeros((B, 2), jnp.int32)], axis=1)
    pos = jax.random.randint(k_pos, (2, B), 0, L - 2, dtype=jnp.int32)
    inputs = {"word": word, "mask": mask, "pos1": pos[0], "pos2": pos[1]}

    # default strategy of the task: 'cls' (SingleTokenPooler)
    out_cls = modular_encoder_forward(params, inputs, strategy="cls")
    jax.block_until_ready(out_cls)
    ref_cls = reference(params, inputs, "cls")
    assert out_cls.shape == (B, H)
    assert jnp.allclose(out_cls, ref_cls, atol=1e-5, rtol=1e-5)

    # also exercise 'cat_entity_reps' (CatEntities)
    out_cat = modular_encoder_forward(params, inputs, strategy="cat_entity_reps")
    jax.block_until_ready(out_cat)
    ref_cat = reference(params, inputs, "cat_entity_reps")
    assert out_cat.shape == (B, 2 * H)
    assert jnp.allclose(out_cat, ref_cat, atol=1e-5, rtol=1e-5)

    print("KERNEL_OK")
</pallas_src>

<mosaic_0001>
module attributes {stable_mosaic.version = 11 : i64} {
  func.func @_cls_kernel(%arg0: memref<2x8xi32, #tpu.memory_space<smem>>, %arg1: memref<2x8xf32, #tpu.memory_space<smem>>, %arg2: memref<50x32xf32, #tpu.memory_space<vmem>>, %arg3: memref<32x32xf32, #tpu.memory_space<vmem>>, %arg4: memref<1x32xf32, #tpu.memory_space<vmem>>, %arg5: memref<32x32xf32, #tpu.memory_space<vmem>>, %arg6: memref<1x32xf32, #tpu.memory_space<vmem>>, %arg7: memref<2x32xf32, #tpu.memory_space<vmem>>) attributes {dimension_semantics = [], scalar_prefetch = 0 : i64, scratch_operands = 0 : i64, tpu.core_type = #tpu.core_type<tc>} {
    %c0 = arith.constant 0 : index
    %c0_0 = arith.constant 0 : index
    %0 = memref.load %arg0[%c0, %c0_0] : memref<2x8xi32, #tpu.memory_space<smem>>
    %c0_i32 = arith.constant 0 : i32
    %1 = arith.maxsi %0, %c0_i32 : i32
    %c49_i32 = arith.constant 49 : i32
    %2 = arith.minsi %1, %c49_i32 : i32
    %c0_1 = arith.constant 0 : index
    %c0_2 = arith.constant 0 : index
    %3 = memref.load %arg1[%c0_1, %c0_2] : memref<2x8xf32, #tpu.memory_space<smem>>
    %4 = arith.index_cast %2 : i32 to index
    %c0_3 = arith.constant 0 : index
    %5 = vector.load %arg2[%4, %c0_3] : memref<50x32xf32, #tpu.memory_space<vmem>>, vector<1x32xf32>
    %6 = vector.broadcast %3 : f32 to vector<1x32xf32>
    %7 = arith.mulf %5, %6 : vector<1x32xf32>
    %c1 = arith.constant 1 : index
    %c0_4 = arith.constant 0 : index
    %8 = memref.load %arg0[%c1, %c0_4] : memref<2x8xi32, #tpu.memory_space<smem>>
    %c0_i32_5 = arith.constant 0 : i32
    %9 = arith.maxsi %8, %c0_i32_5 : i32
    %c49_i32_6 = arith.constant 49 : i32
    %10 = arith.minsi %9, %c49_i32_6 : i32
    %c1_7 = arith.constant 1 : index
    %c0_8 = arith.constant 0 : index
    %11 = memref.load %arg1[%c1_7, %c0_8] : memref<2x8xf32, #tpu.memory_space<smem>>
    %12 = arith.index_cast %10 : i32 to index
    %c0_9 = arith.constant 0 : index
    %13 = vector.load %arg2[%12, %c0_9] : memref<50x32xf32, #tpu.memory_space<vmem>>, vector<1x32xf32>
    %14 = vector.broadcast %11 : f32 to vector<1x32xf32>
    %15 = arith.mulf %13, %14 : vector<1x32xf32>
    %16 = tpu.concatenate %7, %15 in 0 : vector<1x32xf32>, vector<1x32xf32> -> vector<2x32xf32>
    %c0_10 = arith.constant 0 : index
    %c0_11 = arith.constant 0 : index
    %17 = vector.load %arg3[%c0_10, %c0_11] : memref<32x32xf32, #tpu.memory_space<vmem>>, vector<32x32xf32>
    %cst = arith.constant dense<0.000000e+00> : vector<2x32xf32>
    %18 = tpu.matmul %16, %17, %cst {dimension_numbers = #tpu.dot_dimension_numbers<[1], [0], [0], [1], [0, 0, 1, 1], [], []>} : vector<2x32xf32>, vector<32x32xf32>, vector<2x32xf32> -> vector<2x32xf32>
    %c0_12 = arith.constant 0 : index
    %c0_13 = arith.constant 0 : index
    %19 = vector.load %arg4[%c0_12, %c0_13] : memref<1x32xf32, #tpu.memory_space<vmem>>, vector<1x32xf32>
    %20 = vector.broadcast %19 : vector<1x32xf32> to vector<2x32xf32>
    %21 = arith.addf %18, %20 : vector<2x32xf32>
    %22 = math.tanh %21 : vector<2x32xf32>
    %c0_14 = arith.constant 0 : index
    %c0_15 = arith.constant 0 : index
    %23 = vector.load %arg5[%c0_14, %c0_15] : memref<32x32xf32, #tpu.memory_space<vmem>>, vector<32x32xf32>
    %cst_16 = arith.constant dense<0.000000e+00> : vector<2x32xf32>
    %24 = tpu.matmul %22, %23, %cst_16 {dimension_numbers = #tpu.dot_dimension_numbers<[1], [0], [0], [1], [0, 0, 1, 1], [], []>} : vector<2x32xf32>, vector<32x32xf32>, vector<2x32xf32> -> vector<2x32xf32>
    %c0_17 = arith.constant 0 : index
    %c0_18 = arith.constant 0 : index
    %25 = vector.load %arg6[%c0_17, %c0_18] : memref<1x32xf32, #tpu.memory_space<vmem>>, vector<1x32xf32>
    %26 = vector.broadcast %25 : vector<1x32xf32> to vector<2x32xf32>
    %27 = arith.addf %24, %26 : vector<2x32xf32>
    %28 = math.tanh %27 : vector<2x32xf32>
    %c0_19 = arith.constant 0 : index
    %c0_20 = arith.constant 0 : index
    %29 = vector.load %arg7[%c0_19, %c0_20] : memref<2x32xf32, #tpu.memory_space<vmem>>, vector<2x32xf32>
    tpu.vector_store %arg7[%c0_19, %c0_20], %28 {strides = array<i32>} : memref<2x32xf32, #tpu.memory_space<vmem>>, vector<2x32xf32>,
    return
  }
}

</mosaic_0001>

<llo_original>
// kernel: tpu_custom_call.1
$region0: #{tpu_custom_call.1}
  #allocation0 [shape = 'u32[]', space=smem, size = 0x4, offset = 0x4, fixed_abs, tag = 'smem constant byte address 0x4 - core index']
  #allocation1 [shape = 'u32[144,128]{1,0:T(1,128)}', space=vmem, size = 0x12000, scoped, tag = 'internal scratch']
  %s0 = inlined_call_operand.vmem [shape: s32[2,8], index: 0, kind: input, shape index: {}]
  %s1 = inlined_call_operand.vmem [shape: f32[2,8], index: 1, kind: input, shape index: {}]
  %s2 = inlined_call_operand.vmem [shape: f32[50,32], index: 2, kind: input, shape index: {}]
  %s3 = inlined_call_operand.vmem [shape: f32[32,32], index: 3, kind: input, shape index: {}]
  %s4 = inlined_call_operand.vmem [shape: f32[1,32], index: 4, kind: input, shape index: {}]
  %s5 = inlined_call_operand.vmem [shape: f32[32,32], index: 5, kind: input, shape index: {}]
  %s6 = inlined_call_operand.vmem [shape: f32[1,32], index: 6, kind: input, shape index: {}]
  %s7 = inlined_call_operand.hbm [shape: f32[2,32], index: 7, kind: output, shape index: {}]
  %s8 = sld [smem:[#allocation0]]
  $region46: #{tpu_custom_call.1} parent=0
    _
  %s10 = ssub.s32 1, %s8
  %s11 = scalar_select 0, %s10, %s8
  $region1: #{tpu_custom_call.1} parent=0
    #allocation2 [shape = 'u8[1024]{0}', space=smem, size = 0x400, scoped, tag = 'input window, operand 0, single buffered']
    #allocation3 [shape = 's32[1]{0}', space=sflag, size = 0x4, scoped, tag = 'scoped memory for tpu_custom_call.1']
    #allocation4 [shape = 's32[1]{0}', space=sflag, size = 0x4, scoped, tag = 'scoped memory for tpu_custom_call.1']
    #allocation5 [shape = 'u8[1024]{0}', space=smem, size = 0x400, scoped, tag = 'input window, operand 1, single buffered']
    #allocation6 [shape = 's32[1]{0}', space=sflag, size = 0x4, scoped, tag = 'scoped memory for tpu_custom_call.1']
    #allocation7 [shape = 'u8[1024]{0}', space=vmem, size = 0x400, scoped, tag = 'output window, operand 0, single buffered']
    %12 = vsyncpa [#allocation4], 0
    %13 = vsyncpa [#allocation6], 0
    %14 = vsyncpa [#allocation3], 0
    // Predicated region
    $region2: #{tpu_custom_call.1} parent=1 // pred_check
      _
    $region3: #{tpu_custom_call.1} parent=1 // pred_check_branch
      %16 = sbr.rel (0) target = $region5
    $region4: #{tpu_custom_call.1} parent=1 // pred_region
      %s18 = ssub.s32 32, 32
      %19 = vsyncadd [#allocation4], %s18
      %s21 = sshll.u32 %s0, 4
      %s22 = int_to_ptr.vmem [resolvable:$true] %s21
      %24 = dma.vmem_to_smem %s22, 32, [#allocation2], [#allocation4]
    $region5: #{tpu_custom_call.1} parent=1 // pred_fallthru
      _
    // Predicated region
    $region6: #{tpu_custom_call.1} parent=1 // pred_check
      _
    $region7: #{tpu_custom_call.1} parent=1 // pred_check_branch
      %26 = sbr.rel (0) target = $region9
    $region8: #{tpu_custom_call.1} parent=1 // pred_region
      %s28 = ssub.s32 32, 32
      %29 = vsyncadd [#allocation6], %s28
      %s31 = sshll.u32 %s1, 4
      %s32 = int_to_ptr.vmem [resolvable:$true] %s31
      %34 = dma.vmem_to_smem %s32, 32, [#allocation5], [#allocation6]
    $region9: #{tpu_custom_call.1} parent=1 // pred_fallthru
      _
    // Predicated region
    $region10: #{tpu_custom_call.1} parent=1 // pred_check
      _
    $region11: #{tpu_custom_call.1} parent=1 // pred_check_branch
      %36 = sbr.rel (0) target = $region13
    $region12: #{tpu_custom_call.1} parent=1 // pred_region
      _
    $region13: #{tpu_custom_call.1} parent=1 // pred_fallthru
      _
    // Predicated region
    $region14: #{tpu_custom_call.1} parent=1 // pred_check
      _
    $region15: #{tpu_custom_call.1} parent=1 // pred_check_branch
      %38 = sbr.rel (0) target = $region17
    $region16: #{tpu_custom_call.1} parent=1 // pred_region
      _
    $region17: #{tpu_custom_call.1} parent=1 // pred_fallthru
      _
    // Predicated region
    $region18: #{tpu_custom_call.1} parent=1 // pred_check
      _
    $region19: #{tpu_custom_call.1} parent=1 // pred_check_branch
      %40 = sbr.rel (0) target = $region21
    $region20: #{tpu_custom_call.1} parent=1 // pred_region
      _
    $region21: #{tpu_custom_call.1} parent=1 // pred_fallthru
      _
    // Predicated region
    $region22: #{tpu_custom_call.1} parent=1 // pred_check
      _
    $region23: #{tpu_custom_call.1} parent=1 // pred_check_branch
      %42 = sbr.rel (0) target = $region25
    $region24: #{tpu_custom_call.1} parent=1 // pred_region
      _
    $region25: #{tpu_custom_call.1} parent=1 // pred_fallthru
      _
    // Predicated region
    $region26: #{tpu_custom_call.1} parent=1 // pred_check
      _
    $region27: #{tpu_custom_call.1} parent=1 // pred_check_branch
      %44 = sbr.rel (0) target = $region29
    $region28: #{tpu_custom_call.1} parent=1 // pred_region
      _
    $region29: #{tpu_custom_call.1} parent=1 // pred_fallthru
      _
    // Predicated region
    $region30: #{tpu_custom_call.1} parent=1 // pred_check
      _
    $region31: #{tpu_custom_call.1} parent=1 // pred_check_branch
      %46 = sbr.rel (0) target = $region33
    $region32: #{tpu_custom_call.1} parent=1 // pred_region
      %47 = dma.done [#allocation4], 32
    $region33: #{tpu_custom_call.1} parent=1 // pred_fallthru
      _
    // Predicated region
    $region34: #{tpu_custom_call.1} parent=1 // pred_check
      _
    $region35: #{tpu_custom_call.1} parent=1 // pred_check_branch
      %49 = sbr.rel (0) target = $region37
    $region36: #{tpu_custom_call.1} parent=1 // pred_region
      %50 = dma.done [#allocation6], 32
    $region37: #{tpu_custom_call.1} parent=1 // pred_fallthru
      _
    %51 = sfence
    %s52 = sld [smem:[#allocation2]]
    %p53 = scmp.gt.s32.totalorder %s52, 0
    %s54 = scalar_select %p53, %s52, 0
    %p55 = scmp.lt.s32.totalorder %s54, 49
    %s56 = scalar_select %p55, %s54, 49
    %s57 = sld [smem:[#allocation5]]
    %s58 = scalar_lea.vmem %s2, %s56
    %v59 = vld [vmem:[%s58] sm:$0x1]
    %v60 = vstv %s57
    %v61 = vmul.f32 %v59, %v60
    %s62 = sld [smem:[#allocation2 + $0x80]]
    %p63 = scmp.gt.s32.totalorder %s62, 0
    %s64 = scalar_select %p63, %s62, 0
    %p65 = scmp.lt.s32.totalorder %s64, 49
    %s66 = scalar_select %p65, %s64, 49
    %s67 = sld [smem:[#allocation5 + $0x80]]
    %s68 = scalar_lea.vmem %s2, %s66
    %v69 = vld [vmem:[%s68] sm:$0x1]
    %v70 = vstv %s67
    %v71 = vmul.f32 %v69, %v70
    %v73 = vrot.slane %v71, 7
    %vm75 = vcmask 1040384
    %v76 = vsel %vm75, %v61, %v73
    %v77 = vld [vmem:[%s3] sm:$0xff]
    %v78 = vld [vmem:[%s3 + $0x8] sm:$0xff]
    %v79 = vld [vmem:[%s3 + $0x10] sm:$0xff]
    %v80 = vld [vmem:[%s3 + $0x18] sm:$0xff]
    %v81 = vld [vmem:[%s4] sm:$0x1]
    %v83 = vlaneseq
    %v84 = vshrl.u32 %v83, 7
    %v85 = vsub.s32 0, %v84
    %v86 = vrot.slane %v81, %v85
    %vm88 = vcmask 261120
    %v90 = vsel %vm88, %v76, 0
    %92 = vmatprep.subr.mxu0 0.0
    %93 = vmatpush1.msra.mxu0 %v77
    %94 = vmatprep.subr.mxu0 0.0
    %95 = vmatpush1.msra.mxu0 %v78
    %96 = vmatprep.subr.mxu0 0.0
    %97 = vmatpush1.msra.mxu0 %v79
    %98 = vmatprep.subr.mxu0 0.0
    %99 = vmatpush1.msra.mxu0 %v80
    %100 = vmatprep.subr.mxu0 0.0
    %101 = vmatpush1.msra.mxu0 0.0
    %102 = vmatprep.subr.mxu0 0.0
    %103 = vmatpush1.msra.mxu0 0.0
    %104 = vmatprep.subr.mxu0 0.0
    %105 = vmatpush1.msra.mxu0 0.0
    %106 = vmatprep.subr.mxu0 0.0
    %107 = vmatpush1.msra.mxu0 0.0
    %108 = vmatprep.subr.mxu0 0.0
    %109 = vmatpush1.msra.mxu0 0.0
    %110 = vmatprep.subr.mxu0 0.0
    %111 = vmatpush1.msra.mxu0 0.0
    %112 = vmatprep.subr.mxu0 0.0
    %113 = vmatpush1.msra.mxu0 0.0
    %114 = vmatprep.subr.mxu0 0.0
    %115 = vmatpush1.msra.mxu0 0.0
    %116 = vmatprep.subr.mxu0 0.0
    %117 = vmatpush1.msra.mxu0 0.0
    %118 = vmatprep.subr.mxu0 0.0
    %119 = vmatpush1.msra.mxu0 0.0
    %120 = vmatprep.subr.mxu0 0.0
    %121 = vmatpush1.msra.mxu0 0.0
    %122 = vmatprep.subr.mxu0 0.0
    %123 = vmatpush1.msra.mxu0 0.0
    %124 = vmatprep.subr.mxu0 0.0
    %125 = vmatpush1.msra.mxu0 0.0
    %126 = vmatprep.subr.mxu0 0.0
    %127 = vmatpush1.msra.mxu0 0.0
    %128 = vmatprep.subr.mxu0 0.0
    %129 = vmatpush1.msra.mxu0 0.0
    %130 = vmatprep.subr.mxu0 0.0
    %131 = vmatpush1.msra.mxu0 0.0
    %132 = vmatprep.subr.mxu0 0.0
    %133 = vmatpush1.msra.mxu0 0.0
    %134 = vmatprep.subr.mxu0 0.0
    %135 = vmatpush1.msra.mxu0 0.0
    %136 = vmatprep.subr.mxu0 0.0
    %137 = vmatpush1.msra.mxu0 0.0
    %138 = vmatprep.subr.mxu0 0.0
    %139 = vmatpush1.msra.mxu0 0.0
    %140 = vmatprep.subr.mxu0 0.0
    %141 = vmatpush1.msra.mxu0 0.0
    %142 = vmatprep.subr.mxu0 0.0
    %143 = vmatpush1.msra.mxu0 0.0
    %144 = vmatprep.subr.mxu0 0.0
    %145 = vmatpush1.msra.mxu0 0.0
    %146 = vmatprep.subr.mxu0 0.0
    %147 = vmatpush1.msra.mxu0 0.0
    %148 = vmatprep.subr.mxu0 0.0
    %149 = vmatpush1.msra.mxu0 0.0
    %150 = vmatprep.subr.mxu0 0.0
    %151 = vmatpush1.msra.mxu0 0.0
    %152 = vmatprep.subr.mxu0 0.0
    %153 = vmatpush1.msra.mxu0 0.0
    %154 = vmatprep.subr.mxu0 0.0
    %155 = vmatpush1.msra.mxu0 0.0
    %156 = vmatprep.mubr.f32.mxu0 0.0
    %157 = vmatmul.mubr.f32.gmra.mrb[0].mxu0 %v90
    %v158 = vpop.f32.mrb[0].mxu0
    %v159 = vadd.f32 %v86, %v158
    %v160 = vpop.f32.mrb[0].mxu0
    %161 = vdwg.mxu0
    %v162 = vtanh.pop %v159
    %v163 = vld [vmem:[%s5] sm:$0xff]
    %v164 = vld [vmem:[%s5 + $0x8] sm:$0xff]
    %v165 = vld [vmem:[%s5 + $0x10] sm:$0xff]
    %v166 = vld [vmem:[%s5 + $0x18] sm:$0xff]
    %v167 = vld [vmem:[%s6] sm:$0x1]
    %v169 = vlaneseq
    %v170 = vshrl.u32 %v169, 7
    %v171 = vsub.s32 0, %v170
    %v172 = vrot.slane %v167, %v171
    %v175 = vsel %vm88, %v162, 0
    %177 = vmatprep.subr.mxu0 0.0
    %178 = vmatpush1.msra.mxu0 %v163
    %179 = vmatprep.subr.mxu0 0.0
    %180 = vmatpush1.msra.mxu0 %v164
    %181 = vmatprep.subr.mxu0 0.0
    %182 = vmatpush1.msra.mxu0 %v165
    %183 = vmatprep.subr.mxu0 0.0
    %184 = vmatpush1.msra.mxu0 %v166
    %185 = vmatprep.subr.mxu0 0.0
    %186 = vmatpush1.msra.mxu0 0.0
    %187 = vmatprep.subr.mxu0 0.0
    %188 = vmatpush1.msra.mxu0 0.0
    %189 = vmatprep.subr.mxu0 0.0
    %190 = vmatpush1.msra.mxu0 0.0
    %191 = vmatprep.subr.mxu0 0.0
    %192 = vmatpush1.msra.mxu0 0.0
    %193 = vmatprep.subr.mxu0 0.0
    %194 = vmatpush1.msra.mxu0 0.0
    %195 = vmatprep.subr.mxu0 0.0
    %196 = vmatpush1.msra.mxu0 0.0
    %197 = vmatprep.subr.mxu0 0.0
    %198 = vmatpush1.msra.mxu0 0.0
    %199 = vmatprep.subr.mxu0 0.0
    %200 = vmatpush1.msra.mxu0 0.0
    %201 = vmatprep.subr.mxu0 0.0
    %202 = vmatpush1.msra.mxu0 0.0
    %203 = vmatprep.subr.mxu0 0.0
    %204 = vmatpush1.msra.mxu0 0.0
    %205 = vmatprep.subr.mxu0 0.0
    %206 = vmatpush1.msra.mxu0 0.0
    %207 = vmatprep.subr.mxu0 0.0
    %208 = vmatpush1.msra.mxu0 0.0
    %209 = vmatprep.subr.mxu0 0.0
    %210 = vmatpush1.msra.mxu0 0.0
    %211 = vmatprep.subr.mxu0 0.0
    %212 = vmatpush1.msra.mxu0 0.0
    %213 = vmatprep.subr.mxu0 0.0
    %214 = vmatpush1.msra.mxu0 0.0
    %215 = vmatprep.subr.mxu0 0.0
    %216 = vmatpush1.msra.mxu0 0.0
    %217 = vmatprep.subr.mxu0 0.0
    %218 = vmatpush1.msra.mxu0 0.0
    %219 = vmatprep.subr.mxu0 0.0
    %220 = vmatpush1.msra.mxu0 0.0
    %221 = vmatprep.subr.mxu0 0.0
    %222 = vmatpush1.msra.mxu0 0.0
    %223 = vmatprep.subr.mxu0 0.0
    %224 = vmatpush1.msra.mxu0 0.0
    %225 = vmatprep.subr.mxu0 0.0
    %226 = vmatpush1.msra.mxu0 0.0
    %227 = vmatprep.subr.mxu0 0.0
    %228 = vmatpush1.msra.mxu0 0.0
    %229 = vmatprep.subr.mxu0 0.0
    %230 = vmatpush1.msra.mxu0 0.0
    %231 = vmatprep.subr.mxu0 0.0
    %232 = vmatpush1.msra.mxu0 0.0
    %233 = vmatprep.subr.mxu0 0.0
    %234 = vmatpush1.msra.mxu0 0.0
    %235 = vmatprep.subr.mxu0 0.0
    %236 = vmatpush1.msra.mxu0 0.0
    %237 = vmatprep.subr.mxu0 0.0
    %238 = vmatpush1.msra.mxu0 0.0
    %239 = vmatprep.subr.mxu0 0.0
    %240 = vmatpush1.msra.mxu0 0.0
    %241 = vmatprep.mubr.f32.mxu0 0.0
    %242 = vmatmul.mubr.f32.gmra.mrb[0].mxu0 %v175
    %v243 = vpop.f32.mrb[0].mxu0
    %v244 = vadd.f32 %v172, %v243
    %v245 = vpop.f32.mrb[0].mxu0
    %246 = vdwg.mxu0
    %v247 = vtanh.pop %v244
    %vm248 = vcmask 254976
    %249 = vst.msk [vmem:[#allocation7] sm:$0x3] %vm248, %v247
    // Predicated region
    $region38: #{tpu_custom_call.1} parent=1 // pred_check
      _
    $region39: #{tpu_custom_call.1} parent=1 // pred_check_branch
      %251 = sbr.rel (0) target = $region41
    $region40: #{tpu_custom_call.1} parent=1 // pred_region
      %s253 = ssub.s32 32, 32
      %254 = vsyncadd [#allocation3], %s253
      %s256 = sshll.u32 [#allocation7], 4
      %s257 = int_to_ptr.vmem [resolvable:$true] %s256
      %259 = dma.vmem_to_hbm [thread:$0]  %s257, 32, %s7, [#allocation3]
    $region41: #{tpu_custom_call.1} parent=1 // pred_fallthru
      _
    // Predicated region
    $region42: #{tpu_custom_call.1} parent=1 // pred_check
      _
    $region43: #{tpu_custom_call.1} parent=1 // pred_check_branch
      %261 = sbr.rel (0) target = $region45
    $region44: #{tpu_custom_call.1} parent=1 // pred_region
      %262 = dma.done [#allocation3], 32
    $region45: #{tpu_custom_call.1} parent=1 // pred_fallthru
      _
    %263 = vsyncpa [#allocation3], 1
    %264 = vsyncpa [#allocation4], 1
    %265 = vsyncpa [#allocation6], 1

</llo_original>
